<compile_context>
chip_gen: v7x
topology: tpu7x:2x2x1
jax: 0.10.0
libtpu: 0.0.40
codegen_flags: <defaults>
</compile_context>

<pallas_src>
from functools import partial

import numpy as np
import jax
import jax.numpy as jnp
from jax.experimental import pallas as pl
from jax.experimental.pallas import tpu as pltpu


# -----------------------------------------------------------------------------
# Pallas kernel: forward pass of ShadingLoss for TB depth maps (one grid step).
#   SMEM : l (27,), inv_count (1,), kinv (9,)                       [scalars]
#   VMEM : depth (TB,H,W)            -- pipelined per grid step
#          rgb_resid (3,H,W), mask (H,W) -- whole-array resident (single copy)
#   out  : per-image loss broadcast into lane-dense (TB,8,128) tiles
# -----------------------------------------------------------------------------
def shading_loss_kernel(l_ref, invcnt_ref, kinv_ref, depth_ref, rgbres_ref,
                        mask_ref, out_ref):
    f32 = jnp.float32
    tb, H, W = depth_ref.shape

    mask = mask_ref[...]
    inv_count = invcnt_ref[0]

    # Edge-validity masks generated in-kernel (iota + compare); no HBM planes needed.
    row = jax.lax.broadcasted_iota(jnp.int32, (H, W), 0)
    col = jax.lax.broadcasted_iota(jnp.int32, (H, W), 1)
    not_first_row = (row != 0).astype(f32)
    not_last_row = (row != H - 1).astype(f32)
    not_first_col = (col != 0).astype(f32)
    not_last_col = (col != W - 1).astype(f32)

    # Camera back-projection from 9 Kinv scalars (SMEM): p3d[c] = k_c0*x + k_c1*y + k_c2.
    xf = col.astype(f32)
    yf = row.astype(f32)
    p3d = [kinv_ref[3 * c + 0] * xf + kinv_ref[3 * c + 1] * yf + kinv_ref[3 * c + 2]
           for c in range(3)]

    # pltpu.roll follows jnp.roll semantics: out[i] = in[(i - shift) % n].
    def right_nbr(x):   # out[h, w] = x[h, w+1], zero in the last column
        return pltpu.roll(x, W - 1, axis=1) * not_last_col

    def down_nbr(x):    # out[h, w] = x[h+1, w], zero in the last row
        return pltpu.roll(x, H - 1, axis=0) * not_last_row

    def avg3x3(x):
        # zero-padded separable 3-tap box filter == AvgPool2d(3, 1, padding=1),
        # count_include_pad=True.  Rolls run on the XLU; masking is VPU.
        r = x + right_nbr(x) + pltpu.roll(x, 1, axis=1) * not_first_col
        s = r + down_nbr(r) + pltpu.roll(r, 1, axis=0) * not_first_row
        return s * f32(1.0 / 9.0)

    def L(k, c):
        return l_ref[3 * k + c]

    for t in range(tb):                 # static, small unrolled loop over batch block
        depth = depth_ref[t]
        p = [p3d[c] * depth for c in range(3)]
        a = [right_nbr(p[c]) - p[c] for c in range(3)]   # pl - p
        b = [down_nbr(p[c]) - p[c] for c in range(3)]    # pu - p

        # n = normalize(cross(pl - p, pu - p)); F.normalize eps = 1e-12
        n0 = a[1] * b[2] - a[2] * b[1]
        n1 = a[2] * b[0] - a[0] * b[2]
        n2 = a[0] * b[1] - a[1] * b[0]
        ss = n0 * n0 + n1 * n1 + n2 * n2
        inv = jax.lax.rsqrt(jnp.maximum(ss, f32(1e-24)))   # == 1 / max(||n||, 1e-12)
        n0 = n0 * inv
        n1 = n1 * inv
        n2 = n2 * inv

        # shared SH monomials (built once, reused for the 3 channels)
        n01 = n0 * n1
        n12 = n1 * n2
        n20 = n2 * n0
        s0 = n0 * n0
        s1 = n1 * n1
        s2 = n2 * n2

        loss = f32(0.0)
        for c in range(3):
            # B[:, c] = H @ l[:, c] with the constant basis plane folded as a scalar
            # add and the squared-monomial coefficients folded together.
            Bc = (L(0, c)
                  + L(1, c) * n1 + L(2, c) * n2 + L(3, c) * n0
                  + L(4, c) * n01 + L(5, c) * n12 + L(7, c) * n20
                  + (L(8, c) - L(6, c)) * s0 - (L(6, c) + L(8, c)) * s1
                  + (2.0 * L(6, c)) * s2)
            render = Bc * mask                                   # render_img[imask] = B
            diff = (render - avg3x3(render)) - rgbres_ref[c]     # rgb residual hoisted
            loss = loss + jnp.sum(diff * diff * mask)            # scalar accumulate

        out_ref[t] = jnp.full((8, 128), loss * inv_count, jnp.float32)


# -----------------------------------------------------------------------------
# Jitted forward: pads, blocks the batch, and calls the kernel.
# -----------------------------------------------------------------------------
@partial(jax.jit, static_argnums=(6,))
def _forward(depth, l27, inv_count, kinv, rgb_resid, maskp, tb_max):
    """depth: (B, H, W) f32.  Returns (B,) per-image losses."""
    B, H, W = depth.shape
    _, Hp, Wp = rgb_resid.shape

    # Batch blocking: amortize per-grid-step overhead but keep >= 2 grid steps when
    # B >= 2 so both v7x TensorCores get work (v5e/v6e have a single TC).
    tb = 1 if B < 2 else max(1, min(tb_max, B // 2))
    Bp = ((B + tb - 1) // tb) * tb
    depth_p = jnp.pad(depth, ((0, Bp - B), (0, Hp - H), (0, Wp - W)))

    # Explicit scoped-VMEM budget from the actual blocks (+headroom for temporaries).
    block_bytes = (2 * tb * Hp * Wp * 4        # depth blocks, double-buffered
                   + 4 * Hp * Wp * 4           # rgb residual (3) + mask (1), single copy
                   + 2 * tb * 8 * 128 * 4)     # output tiles
    vmem_limit = int(min(64 * 1024 * 1024, max(32 * 1024 * 1024, 4 * block_bytes)))

    out = pl.pallas_call(
        shading_loss_kernel,
        out_shape=jax.ShapeDtypeStruct((Bp, 8, 128), jnp.float32),
        grid=(Bp // tb,),
        in_specs=[
            pl.BlockSpec(memory_space=pltpu.MemorySpace.SMEM),    # l (27,)
            pl.BlockSpec(memory_space=pltpu.MemorySpace.SMEM),    # inv_count (1,)
            pl.BlockSpec(memory_space=pltpu.MemorySpace.SMEM),    # kinv (9,)
            pl.BlockSpec((tb, Hp, Wp), lambda b: (b, 0, 0)),      # depth (pipelined)
            pl.BlockSpec(memory_space=pltpu.MemorySpace.VMEM),    # rgb residual (resident)
            pl.BlockSpec(memory_space=pltpu.MemorySpace.VMEM),    # mask (resident)
        ],
        out_specs=pl.BlockSpec((tb, 8, 128), lambda b: (b, 0, 0)),
        compiler_params=pltpu.CompilerParams(
            dimension_semantics=("parallel",),
            vmem_limit_bytes=vmem_limit),
    )(l27, inv_count, kinv, depth_p, rgb_resid, maskp)

    return out[:B, 0, 0]


# -----------------------------------------------------------------------------
# Factory (mirrors the PyTorch module: precompute in __init__, jit the forward).
# -----------------------------------------------------------------------------
def _round_up(x, m):
    return ((x + m - 1) // m) * m


def _avg3x3_chw(x):
    C, H, W = x.shape
    xp = jnp.pad(x, ((0, 0), (1, 1), (1, 1)))
    s = sum(xp[:, dy:dy + H, dx:dx + W] for dy in range(3) for dx in range(3))
    return s / 9.0


def make_shading_loss(rgb_hwc, mask, l, camera_param, tb_max=8):
    """Precompute depth-independent terms once; return callable depth -> loss
    (scalar for a (H,W) depth, (B,) per-image losses for (B,H,W))."""
    rgb_hwc = jnp.asarray(rgb_hwc, jnp.float32)
    H, W, _ = rgb_hwc.shape
    maskf = (jnp.asarray(mask) > 0).astype(jnp.float32)
    l27 = jnp.asarray(l, jnp.float32).reshape(-1)                  # l[k, c] -> index 3k + c
    kinv = jnp.linalg.inv(jnp.asarray(camera_param, jnp.float32)).reshape(-1)

    rgb_chw = jnp.transpose(rgb_hwc, (2, 0, 1))
    rgb_resid = rgb_chw - _avg3x3_chw(rgb_chw)                     # rgb - avgpool(rgb)
    # Guard: empty mask -> loss 0 (PyTorch would produce NaN).
    count = jnp.maximum(jnp.sum(maskf) * 3.0, 1.0)
    inv_count = (1.0 / count).reshape(1).astype(jnp.float32)

    # Lane/sublane padding (exact: zero-depth neighbors reproduce the zero-filled
    # pl/pu and masked-out pixels contribute nothing to the reduction).
    Hp = _round_up(H, 8)
    Wp = _round_up(W, 128)
    rgb_resid_p = jnp.pad(rgb_resid, ((0, 0), (0, Hp - H), (0, Wp - W)))
    mask_p = jnp.pad(maskf, ((0, Hp - H), (0, Wp - W)))

    def loss_fn(depth):
        depth = jnp.asarray(depth, jnp.float32)
        squeeze = depth.ndim == 2
        if squeeze:
            depth = depth[None]
        losses = _forward(depth, l27, inv_count, kinv, rgb_resid_p, mask_p, tb_max)
        return losses[0] if squeeze else losses

    return loss_fn


# -----------------------------------------------------------------------------
# Pure-JAX reference (mirrors the PyTorch forward) for the self-test.
# Elementwise formulations throughout so default TPU matmul precision (bf16 passes)
# does not pollute the comparison.
# -----------------------------------------------------------------------------
def make_p3d_homo(H, W, camera_param):
    Kinv = jnp.linalg.inv(camera_param.astype(jnp.float32))
    yy, xx = jnp.meshgrid(jnp.arange(H, dtype=jnp.float32),
                          jnp.arange(W, dtype=jnp.float32), indexing="ij")
    return jnp.stack([Kinv[c, 0] * xx + Kinv[c, 1] * yy + Kinv[c, 2]
                      for c in range(3)], axis=-1)                  # (H, W, 3)


def reference_loss(depth, rgb_hwc, mask, l, camera_param):
    H, W, _ = rgb_hwc.shape
    p3d = make_p3d_homo(H, W, camera_param)
    p = p3d * depth[..., None]
    p_left = jnp.zeros_like(p).at[:, :-1, :].set(p[:, 1:, :])
    p_up = jnp.zeros_like(p).at[:-1, :, :].set(p[1:, :, :])
    n = jnp.cross(p_left - p, p_up - p)
    ss = jnp.sum(n * n, axis=-1, keepdims=True)
    n = n * jax.lax.rsqrt(jnp.maximum(ss, 1e-24))   # == F.normalize(n, dim=-1, eps=1e-12)
    n0, n1, n2 = n[..., 0], n[..., 1], n[..., 2]
    basis = [jnp.ones_like(n0), n1, n2, n0, n0 * n1, n1 * n2,
             -n0 * n0 - n1 * n1 + 2.0 * n2 * n2, n2 * n0, n0 * n0 - n1 * n1]
    Bimg = sum(basis[k][..., None] * l[k][None, None, :] for k in range(9))
    maskf = (mask > 0).astype(jnp.float32)
    render = Bimg * maskf[..., None]

    def avgpool(x):
        xp = jnp.pad(x, ((1, 1), (1, 1), (0, 0)))
        return sum(xp[dy:dy + H, dx:dx + W, :] for dy in range(3) for dx in range(3)) / 9.0

    diff = (render - avgpool(render)) - (rgb_hwc - avgpool(rgb_hwc))
    return jnp.sum(diff * diff * maskf[..., None]) / jnp.maximum(jnp.sum(maskf) * 3.0, 1.0)


if __name__ == "__main__":
    # W = 128 keeps every (H, W) plane lane-dense (full vreg lane utilization).
    B, H, W = 2, 16, 128
    key = jax.random.PRNGKey(0)
    k_rgb, k_mask, k_depth, k_l = jax.random.split(key, 4)

    rgb = jax.random.uniform(k_rgb, (H, W, 3), dtype=jnp.float32)
    mask = (jax.random.uniform(k_mask, (H, W), dtype=jnp.float32) > 0.35).astype(jnp.float32)
    depth = 1.0 + jax.random.uniform(k_depth, (B, H, W), dtype=jnp.float32)
    l = 0.5 * jax.random.normal(k_l, (9, 3), dtype=jnp.float32)
    camera_param = jnp.array(
        [[20.0, 0.0, (W - 1) / 2.0],
         [0.0, 20.0, (H - 1) / 2.0],
         [0.0, 0.0, 1.0]],
        dtype=jnp.float32,
    )

    loss_fn = make_shading_loss(rgb, mask, l, camera_param)
    losses = jax.block_until_ready(loss_fn(depth))

    ref = jnp.stack([reference_loss(depth[b], rgb, mask, l, camera_param)
                     for b in range(B)])
    np.testing.assert_allclose(np.asarray(losses), np.asarray(ref), rtol=1e-5, atol=1e-6)
    print("KERNEL_OK")
</pallas_src>

<mosaic_0001>
module attributes {stable_mosaic.version = 11 : i64} {
  func.func @shading_loss_kernel(%arg0: i32, %arg1: memref<27xf32, #tpu.memory_space<smem>>, %arg2: memref<1xf32, #tpu.memory_space<smem>>, %arg3: memref<9xf32, #tpu.memory_space<smem>>, %arg4: memref<1x16x128xf32, #tpu.memory_space<vmem>>, %arg5: memref<3x16x128xf32, #tpu.memory_space<vmem>>, %arg6: memref<16x128xf32, #tpu.memory_space<vmem>>, %arg7: memref<1x8x128xf32, #tpu.memory_space<vmem>>) attributes {dimension_semantics = [#tpu.dimension_semantics<parallel>], iteration_bounds = array<i64: 2>, scalar_prefetch = 0 : i64, scratch_operands = 0 : i64, tpu.core_type = #tpu.core_type<tc>, window_params = [{transform_indices = @transform_0, window_bounds = array<i64: 27>}, {transform_indices = @transform_1, window_bounds = array<i64: 1>}, {transform_indices = @transform_2, window_bounds = array<i64: 9>}, {transform_indices = @transform_3, window_bounds = array<i64: 1, 16, 128>}, {pipeline_mode = #tpu.pipeline_mode<synchronous>, transform_indices = @transform_4, window_bounds = array<i64: 3, 16, 128>}, {pipeline_mode = #tpu.pipeline_mode<synchronous>, transform_indices = @transform_5, window_bounds = array<i64: 16, 128>}, {transform_indices = @transform_6, window_bounds = array<i64: 1, 8, 128>}]} {
    %c0 = arith.constant 0 : index
    %c0_0 = arith.constant 0 : index
    %0 = vector.load %arg6[%c0, %c0_0] : memref<16x128xf32, #tpu.memory_space<vmem>>, vector<16x128xf32>
    %c0_1 = arith.constant 0 : index
    %1 = memref.load %arg2[%c0_1] : memref<1xf32, #tpu.memory_space<smem>>
    %2 = tpu.iota {dimensions = array<i32: 0>} : vector<16x128xi32>
    %3 = tpu.iota {dimensions = array<i32: 1>} : vector<16x128xi32>
    %c0_i32 = arith.constant 0 : i32
    %4 = vector.broadcast %c0_i32 : i32 to vector<16x128xi32>
    %5 = arith.cmpi ne, %2, %4 : vector<16x128xi32>
    %6 = arith.extui %5 : vector<16x128xi1> to vector<16x128xi32>
    %7 = arith.sitofp %6 : vector<16x128xi32> to vector<16x128xf32>
    %c15_i32 = arith.constant 15 : i32
    %8 = vector.broadcast %c15_i32 : i32 to vector<16x128xi32>
    %9 = arith.cmpi ne, %2, %8 : vector<16x128xi32>
    %10 = arith.extui %9 : vector<16x128xi1> to vector<16x128xi32>
    %11 = arith.sitofp %10 : vector<16x128xi32> to vector<16x128xf32>
    %c0_i32_2 = arith.constant 0 : i32
    %12 = vector.broadcast %c0_i32_2 : i32 to vector<16x128xi32>
    %13 = arith.cmpi ne, %3, %12 : vector<16x128xi32>
    %14 = arith.extui %13 : vector<16x128xi1> to vector<16x128xi32>
    %15 = arith.sitofp %14 : vector<16x128xi32> to vector<16x128xf32>
    %c127_i32 = arith.constant 127 : i32
    %16 = vector.broadcast %c127_i32 : i32 to vector<16x128xi32>
    %17 = arith.cmpi ne, %3, %16 : vector<16x128xi32>
    %18 = arith.extui %17 : vector<16x128xi1> to vector<16x128xi32>
    %19 = arith.sitofp %18 : vector<16x128xi32> to vector<16x128xf32>
    %20 = arith.sitofp %3 : vector<16x128xi32> to vector<16x128xf32>
    %21 = arith.sitofp %2 : vector<16x128xi32> to vector<16x128xf32>
    %c0_3 = arith.constant 0 : index
    %22 = memref.load %arg3[%c0_3] : memref<9xf32, #tpu.memory_space<smem>>
    %23 = vector.broadcast %22 : f32 to vector<16x128xf32>
    %24 = arith.mulf %23, %20 : vector<16x128xf32>
    %c1 = arith.constant 1 : index
    %25 = memref.load %arg3[%c1] : memref<9xf32, #tpu.memory_space<smem>>
    %26 = vector.broadcast %25 : f32 to vector<16x128xf32>
    %27 = arith.mulf %26, %21 : vector<16x128xf32>
    %28 = arith.addf %24, %27 : vector<16x128xf32>
    %c2 = arith.constant 2 : index
    %29 = memref.load %arg3[%c2] : memref<9xf32, #tpu.memory_space<smem>>
    %30 = vector.broadcast %29 : f32 to vector<16x128xf32>
    %31 = arith.addf %28, %30 : vector<16x128xf32>
    %c3 = arith.constant 3 : index
    %32 = memref.load %arg3[%c3] : memref<9xf32, #tpu.memory_space<smem>>
    %33 = vector.broadcast %32 : f32 to vector<16x128xf32>
    %34 = arith.mulf %33, %20 : vector<16x128xf32>
    %c4 = arith.constant 4 : index
    %35 = memref.load %arg3[%c4] : memref<9xf32, #tpu.memory_space<smem>>
    %36 = vector.broadcast %35 : f32 to vector<16x128xf32>
    %37 = arith.mulf %36, %21 : vector<16x128xf32>
    %38 = arith.addf %34, %37 : vector<16x128xf32>
    %c5 = arith.constant 5 : index
    %39 = memref.load %arg3[%c5] : memref<9xf32, #tpu.memory_space<smem>>
    %40 = vector.broadcast %39 : f32 to vector<16x128xf32>
    %41 = arith.addf %38, %40 : vector<16x128xf32>
    %c6 = arith.constant 6 : index
    %42 = memref.load %arg3[%c6] : memref<9xf32, #tpu.memory_space<smem>>
    %43 = vector.broadcast %42 : f32 to vector<16x128xf32>
    %44 = arith.mulf %43, %20 : vector<16x128xf32>
    %c7 = arith.constant 7 : index
    %45 = memref.load %arg3[%c7] : memref<9xf32, #tpu.memory_space<smem>>
    %46 = vector.broadcast %45 : f32 to vector<16x128xf32>
    %47 = arith.mulf %46, %21 : vector<16x128xf32>
    %48 = arith.addf %44, %47 : vector<16x128xf32>
    %c8 = arith.constant 8 : index
    %49 = memref.load %arg3[%c8] : memref<9xf32, #tpu.memory_space<smem>>
    %50 = vector.broadcast %49 : f32 to vector<16x128xf32>
    %51 = arith.addf %48, %50 : vector<16x128xf32>
    %c0_4 = arith.constant 0 : index
    %c0_5 = arith.constant 0 : index
    %c0_6 = arith.constant 0 : index
    %52 = vector.load %arg4[%c0_4, %c0_5, %c0_6] : memref<1x16x128xf32, #tpu.memory_space<vmem>>, vector<1x16x128xf32>
    %53 = vector.shape_cast %52 : vector<1x16x128xf32> to vector<16x128xf32>
    %54 = arith.mulf %31, %53 : vector<16x128xf32>
    %55 = arith.mulf %41, %53 : vector<16x128xf32>
    %56 = arith.mulf %51, %53 : vector<16x128xf32>
    %c127_i32_7 = arith.constant 127 : i32
    %57 = tpu.dynamic_rotate %54 by %c127_i32_7 dim 1 : vector<16x128xf32>, i32 -> vector<16x128xf32>
    %58 = arith.mulf %57, %19 : vector<16x128xf32>
    %59 = arith.subf %58, %54 : vector<16x128xf32>
    %c127_i32_8 = arith.constant 127 : i32
    %60 = tpu.dynamic_rotate %55 by %c127_i32_8 dim 1 : vector<16x128xf32>, i32 -> vector<16x128xf32>
    %61 = arith.mulf %60, %19 : vector<16x128xf32>
    %62 = arith.subf %61, %55 : vector<16x128xf32>
    %c127_i32_9 = arith.constant 127 : i32
    %63 = tpu.dynamic_rotate %56 by %c127_i32_9 dim 1 : vector<16x128xf32>, i32 -> vector<16x128xf32>
    %64 = arith.mulf %63, %19 : vector<16x128xf32>
    %65 = arith.subf %64, %56 : vector<16x128xf32>
    %c15_i32_10 = arith.constant 15 : i32
    %66 = tpu.dynamic_rotate %54 by %c15_i32_10 dim 0 : vector<16x128xf32>, i32 -> vector<16x128xf32>
    %67 = arith.mulf %66, %11 : vector<16x128xf32>
    %68 = arith.subf %67, %54 : vector<16x128xf32>
    %c15_i32_11 = arith.constant 15 : i32
    %69 = tpu.dynamic_rotate %55 by %c15_i32_11 dim 0 : vector<16x128xf32>, i32 -> vector<16x128xf32>
    %70 = arith.mulf %69, %11 : vector<16x128xf32>
    %71 = arith.subf %70, %55 : vector<16x128xf32>
    %c15_i32_12 = arith.constant 15 : i32
    %72 = tpu.dynamic_rotate %56 by %c15_i32_12 dim 0 : vector<16x128xf32>, i32 -> vector<16x128xf32>
    %73 = arith.mulf %72, %11 : vector<16x128xf32>
    %74 = arith.subf %73, %56 : vector<16x128xf32>
    %75 = arith.mulf %62, %74 : vector<16x128xf32>
    %76 = arith.mulf %65, %71 : vector<16x128xf32>
    %77 = arith.subf %75, %76 : vector<16x128xf32>
    %78 = arith.mulf %65, %68 : vector<16x128xf32>
    %79 = arith.mulf %59, %74 : vector<16x128xf32>
    %80 = arith.subf %78, %79 : vector<16x128xf32>
    %81 = arith.mulf %59, %71 : vector<16x128xf32>
    %82 = arith.mulf %62, %68 : vector<16x128xf32>
    %83 = arith.subf %81, %82 : vector<16x128xf32>
    %84 = arith.mulf %77, %77 : vector<16x128xf32>
    %85 = arith.mulf %80, %80 : vector<16x128xf32>
    %86 = arith.addf %84, %85 : vector<16x128xf32>
    %87 = arith.mulf %83, %83 : vector<16x128xf32>
    %88 = arith.addf %86, %87 : vector<16x128xf32>
    %cst = arith.constant 1.000000e-24 : f32
    %89 = vector.broadcast %cst : f32 to vector<16x128xf32>
    %90 = arith.maximumf %88, %89 : vector<16x128xf32>
    %91 = math.rsqrt %90 : vector<16x128xf32>
    %92 = arith.mulf %77, %91 : vector<16x128xf32>
    %93 = arith.mulf %80, %91 : vector<16x128xf32>
    %94 = arith.mulf %83, %91 : vector<16x128xf32>
    %95 = arith.mulf %92, %93 : vector<16x128xf32>
    %96 = arith.mulf %93, %94 : vector<16x128xf32>
    %97 = arith.mulf %94, %92 : vector<16x128xf32>
    %98 = arith.mulf %92, %92 : vector<16x128xf32>
    %99 = arith.mulf %93, %93 : vector<16x128xf32>
    %100 = arith.mulf %94, %94 : vector<16x128xf32>
    %c0_13 = arith.constant 0 : index
    %101 = memref.load %arg1[%c0_13] : memref<27xf32, #tpu.memory_space<smem>>
    %c3_14 = arith.constant 3 : index
    %102 = memref.load %arg1[%c3_14] : memref<27xf32, #tpu.memory_space<smem>>
    %103 = vector.broadcast %102 : f32 to vector<16x128xf32>
    %104 = arith.mulf %103, %93 : vector<16x128xf32>
    %105 = vector.broadcast %101 : f32 to vector<16x128xf32>
    %106 = arith.addf %105, %104 : vector<16x128xf32>
    %c6_15 = arith.constant 6 : index
    %107 = memref.load %arg1[%c6_15] : memref<27xf32, #tpu.memory_space<smem>>
    %108 = vector.broadcast %107 : f32 to vector<16x128xf32>
    %109 = arith.mulf %108, %94 : vector<16x128xf32>
    %110 = arith.addf %106, %109 : vector<16x128xf32>
    %c9 = arith.constant 9 : index
    %111 = memref.load %arg1[%c9] : memref<27xf32, #tpu.memory_space<smem>>
    %112 = vector.broadcast %111 : f32 to vector<16x128xf32>
    %113 = arith.mulf %112, %92 : vector<16x128xf32>
    %114 = arith.addf %110, %113 : vector<16x128xf32>
    %c12 = arith.constant 12 : index
    %115 = memref.load %arg1[%c12] : memref<27xf32, #tpu.memory_space<smem>>
    %116 = vector.broadcast %115 : f32 to vector<16x128xf32>
    %117 = arith.mulf %116, %95 : vector<16x128xf32>
    %118 = arith.addf %114, %117 : vector<16x128xf32>
    %c15 = arith.constant 15 : index
    %119 = memref.load %arg1[%c15] : memref<27xf32, #tpu.memory_space<smem>>
    %120 = vector.broadcast %119 : f32 to vector<16x128xf32>
    %121 = arith.mulf %120, %96 : vector<16x128xf32>
    %122 = arith.addf %118, %121 : vector<16x128xf32>
    %c21 = arith.constant 21 : index
    %123 = memref.load %arg1[%c21] : memref<27xf32, #tpu.memory_space<smem>>
    %124 = vector.broadcast %123 : f32 to vector<16x128xf32>
    %125 = arith.mulf %124, %97 : vector<16x128xf32>
    %126 = arith.addf %122, %125 : vector<16x128xf32>
    %c24 = arith.constant 24 : index
    %127 = memref.load %arg1[%c24] : memref<27xf32, #tpu.memory_space<smem>>
    %c18 = arith.constant 18 : index
    %128 = memref.load %arg1[%c18] : memref<27xf32, #tpu.memory_space<smem>>
    %129 = arith.subf %127, %128 : f32
    %130 = vector.broadcast %129 : f32 to vector<16x128xf32>
    %131 = arith.mulf %130, %98 : vector<16x128xf32>
    %132 = arith.addf %126, %131 : vector<16x128xf32>
    %c18_16 = arith.constant 18 : index
    %133 = memref.load %arg1[%c18_16] : memref<27xf32, #tpu.memory_space<smem>>
    %c24_17 = arith.constant 24 : index
    %134 = memref.load %arg1[%c24_17] : memref<27xf32, #tpu.memory_space<smem>>
    %135 = arith.addf %133, %134 : f32
    %136 = vector.broadcast %135 : f32 to vector<16x128xf32>
    %137 = arith.mulf %136, %99 : vector<16x128xf32>
    %138 = arith.subf %132, %137 : vector<16x128xf32>
    %c18_18 = arith.constant 18 : index
    %139 = memref.load %arg1[%c18_18] : memref<27xf32, #tpu.memory_space<smem>>
    %cst_19 = arith.constant 2.000000e+00 : f32
    %140 = arith.mulf %cst_19, %139 : f32
    %141 = vector.broadcast %140 : f32 to vector<16x128xf32>
    %142 = arith.mulf %141, %100 : vector<16x128xf32>
    %143 = arith.addf %138, %142 : vector<16x128xf32>
    %144 = arith.mulf %143, %0 : vector<16x128xf32>
    %c127_i32_20 = arith.constant 127 : i32
    %145 = tpu.dynamic_rotate %144 by %c127_i32_20 dim 1 : vector<16x128xf32>, i32 -> vector<16x128xf32>
    %146 = arith.mulf %145, %19 : vector<16x128xf32>
    %147 = arith.addf %144, %146 : vector<16x128xf32>
    %c1_i32 = arith.constant 1 : i32
    %148 = tpu.dynamic_rotate %144 by %c1_i32 dim 1 : vector<16x128xf32>, i32 -> vector<16x128xf32>
    %149 = arith.mulf %148, %15 : vector<16x128xf32>
    %150 = arith.addf %147, %149 : vector<16x128xf32>
    %c15_i32_21 = arith.constant 15 : i32
    %151 = tpu.dynamic_rotate %150 by %c15_i32_21 dim 0 : vector<16x128xf32>, i32 -> vector<16x128xf32>
    %152 = arith.mulf %151, %11 : vector<16x128xf32>
    %153 = arith.addf %150, %152 : vector<16x128xf32>
    %c1_i32_22 = arith.constant 1 : i32
    %154 = tpu.dynamic_rotate %150 by %c1_i32_22 dim 0 : vector<16x128xf32>, i32 -> vector<16x128xf32>
    %155 = arith.mulf %154, %7 : vector<16x128xf32>
    %156 = arith.addf %153, %155 : vector<16x128xf32>
    %cst_23 = arith.constant 0.111111112 : f32
    %157 = vector.broadcast %cst_23 : f32 to vector<16x128xf32>
    %158 = arith.mulf %156, %157 : vector<16x128xf32>
    %159 = arith.subf %144, %158 : vector<16x128xf32>
    %c0_24 = arith.constant 0 : index
    %c0_25 = arith.constant 0 : index
    %c0_26 = arith.constant 0 : index
    %160 = vector.load %arg5[%c0_24, %c0_25, %c0_26] : memref<3x16x128xf32, #tpu.memory_space<vmem>>, vector<1x16x128xf32>
    %161 = vector.shape_cast %160 : vector<1x16x128xf32> to vector<16x128xf32>
    %162 = arith.subf %159, %161 : vector<16x128xf32>
    %163 = arith.mulf %162, %162 : vector<16x128xf32>
    %164 = arith.mulf %163, %0 : vector<16x128xf32>
    %165 = vector.shape_cast %164 : vector<16x128xf32> to vector<1x16x128xf32>
    %cst_27 = arith.constant dense<0.000000e+00> : vector<1xf32>
    %166 = vector.multi_reduction <add>, %165, %cst_27 [1, 2] : vector<1x16x128xf32> to vector<1xf32>
    %167 = vector.shape_cast %166 : vector<1xf32> to vector<1x1x1xf32>
    %168 = vector.extract %167[0, 0, 0] : f32 from vector<1x1x1xf32>
    %cst_28 = arith.constant 0.000000e+00 : f32
    %169 = arith.addf %cst_28, %168 : f32
    %c1_29 = arith.constant 1 : index
    %170 = memref.load %arg1[%c1_29] : memref<27xf32, #tpu.memory_space<smem>>
    %c4_30 = arith.constant 4 : index
    %171 = memref.load %arg1[%c4_30] : memref<27xf32, #tpu.memory_space<smem>>
    %172 = vector.broadcast %171 : f32 to vector<16x128xf32>
    %173 = arith.mulf %172, %93 : vector<16x128xf32>
    %174 = vector.broadcast %170 : f32 to vector<16x128xf32>
    %175 = arith.addf %174, %173 : vector<16x128xf32>
    %c7_31 = arith.constant 7 : index
    %176 = memref.load %arg1[%c7_31] : memref<27xf32, #tpu.memory_space<smem>>
    %177 = vector.broadcast %176 : f32 to vector<16x128xf32>
    %178 = arith.mulf %177, %94 : vector<16x128xf32>
    %179 = arith.addf %175, %178 : vector<16x128xf32>
    %c10 = arith.constant 10 : index
    %180 = memref.load %arg1[%c10] : memref<27xf32, #tpu.memory_space<smem>>
    %181 = vector.broadcast %180 : f32 to vector<16x128xf32>
    %182 = arith.mulf %181, %92 : vector<16x128xf32>
    %183 = arith.addf %179, %182 : vector<16x128xf32>
    %c13 = arith.constant 13 : index
    %184 = memref.load %arg1[%c13] : memref<27xf32, #tpu.memory_space<smem>>
    %185 = vector.broadcast %184 : f32 to vector<16x128xf32>
    %186 = arith.mulf %185, %95 : vector<16x128xf32>
    %187 = arith.addf %183, %186 : vector<16x128xf32>
    %c16 = arith.constant 16 : index
    %188 = memref.load %arg1[%c16] : memref<27xf32, #tpu.memory_space<smem>>
    %189 = vector.broadcast %188 : f32 to vector<16x128xf32>
    %190 = arith.mulf %189, %96 : vector<16x128xf32>
    %191 = arith.addf %187, %190 : vector<16x128xf32>
    %c22 = arith.constant 22 : index
    %192 = memref.load %arg1[%c22] : memref<27xf32, #tpu.memory_space<smem>>
    %193 = vector.broadcast %192 : f32 to vector<16x128xf32>
    %194 = arith.mulf %193, %97 : vector<16x128xf32>
    %195 = arith.addf %191, %194 : vector<16x128xf32>
    %c25 = arith.constant 25 : index
    %196 = memref.load %arg1[%c25] : memref<27xf32, #tpu.memory_space<smem>>
    %c19 = arith.constant 19 : index
    %197 = memref.load %arg1[%c19] : memref<27xf32, #tpu.memory_space<smem>>
    %198 = arith.subf %196, %197 : f32
    %199 = vector.broadcast %198 : f32 to vector<16x128xf32>
    %200 = arith.mulf %199, %98 : vector<16x128xf32>
    %201 = arith.addf %195, %200 : vector<16x128xf32>
    %c19_32 = arith.constant 19 : index
    %202 = memref.load %arg1[%c19_32] : memref<27xf32, #tpu.memory_space<smem>>
    %c25_33 = arith.constant 25 : index
    %203 = memref.load %arg1[%c25_33] : memref<27xf32, #tpu.memory_space<smem>>
    %204 = arith.addf %202, %203 : f32
    %205 = vector.broadcast %204 : f32 to vector<16x128xf32>
    %206 = arith.mulf %205, %99 : vector<16x128xf32>
    %207 = arith.subf %201, %206 : vector<16x128xf32>
    %c19_34 = arith.constant 19 : index
    %208 = memref.load %arg1[%c19_34] : memref<27xf32, #tpu.memory_space<smem>>
    %cst_35 = arith.constant 2.000000e+00 : f32
    %209 = arith.mulf %cst_35, %208 : f32
    %210 = vector.broadcast %209 : f32 to vector<16x128xf32>
    %211 = arith.mulf %210, %100 : vector<16x128xf32>
    %212 = arith.addf %207, %211 : vector<16x128xf32>
    %213 = arith.mulf %212, %0 : vector<16x128xf32>
    %c127_i32_36 = arith.constant 127 : i32
    %214 = tpu.dynamic_rotate %213 by %c127_i32_36 dim 1 : vector<16x128xf32>, i32 -> vector<16x128xf32>
    %215 = arith.mulf %214, %19 : vector<16x128xf32>
    %216 = arith.addf %213, %215 : vector<16x128xf32>
    %c1_i32_37 = arith.constant 1 : i32
    %217 = tpu.dynamic_rotate %213 by %c1_i32_37 dim 1 : vector<16x128xf32>, i32 -> vector<16x128xf32>
    %218 = arith.mulf %217, %15 : vector<16x128xf32>
    %219 = arith.addf %216, %218 : vector<16x128xf32>
    %c15_i32_38 = arith.constant 15 : i32
    %220 = tpu.dynamic_rotate %219 by %c15_i32_38 dim 0 : vector<16x128xf32>, i32 -> vector<16x128xf32>
    %221 = arith.mulf %220, %11 : vector<16x128xf32>
    %222 = arith.addf %219, %221 : vector<16x128xf32>
    %c1_i32_39 = arith.constant 1 : i32
    %223 = tpu.dynamic_rotate %219 by %c1_i32_39 dim 0 : vector<16x128xf32>, i32 -> vector<16x128xf32>
    %224 = arith.mulf %223, %7 : vector<16x128xf32>
    %225 = arith.addf %222, %224 : vector<16x128xf32>
    %cst_40 = arith.constant 0.111111112 : f32
    %226 = vector.broadcast %cst_40 : f32 to vector<16x128xf32>
    %227 = arith.mulf %225, %226 : vector<16x128xf32>
    %228 = arith.subf %213, %227 : vector<16x128xf32>
    %c1_41 = arith.constant 1 : index
    %c0_42 = arith.constant 0 : index
    %c0_43 = arith.constant 0 : index
    %229 = vector.load %arg5[%c1_41, %c0_42, %c0_43] : memref<3x16x128xf32, #tpu.memory_space<vmem>>, vector<1x16x128xf32>
    %230 = vector.shape_cast %229 : vector<1x16x128xf32> to vector<16x128xf32>
    %231 = arith.subf %228, %230 : vector<16x128xf32>
    %232 = arith.mulf %231, %231 : vector<16x128xf32>
    %233 = arith.mulf %232, %0 : vector<16x128xf32>
    %234 = vector.shape_cast %233 : vector<16x128xf32> to vector<1x16x128xf32>
    %cst_44 = arith.constant dense<0.000000e+00> : vector<1xf32>
    %235 = vector.multi_reduction <add>, %234, %cst_44 [1, 2] : vector<1x16x128xf32> to vector<1xf32>
    %236 = vector.shape_cast %235 : vector<1xf32> to vector<1x1x1xf32>
    %237 = vector.extract %236[0, 0, 0] : f32 from vector<1x1x1xf32>
    %238 = arith.addf %169, %237 : f32
    %c2_45 = arith.constant 2 : index
    %239 = memref.load %arg1[%c2_45] : memref<27xf32, #tpu.memory_space<smem>>
    %c5_46 = arith.constant 5 : index
    %240 = memref.load %arg1[%c5_46] : memref<27xf32, #tpu.memory_space<smem>>
    %241 = vector.broadcast %240 : f32 to vector<16x128xf32>
    %242 = arith.mulf %241, %93 : vector<16x128xf32>
    %243 = vector.broadcast %239 : f32 to vector<16x128xf32>
    %244 = arith.addf %243, %242 : vector<16x128xf32>
    %c8_47 = arith.constant 8 : index
    %245 = memref.load %arg1[%c8_47] : memref<27xf32, #tpu.memory_space<smem>>
    %246 = vector.broadcast %245 : f32 to vector<16x128xf32>
    %247 = arith.mulf %246, %94 : vector<16x128xf32>
    %248 = arith.addf %244, %247 : vector<16x128xf32>
    %c11 = arith.constant 11 : index
    %249 = memref.load %arg1[%c11] : memref<27xf32, #tpu.memory_space<smem>>
    %250 = vector.broadcast %249 : f32 to vector<16x128xf32>
    %251 = arith.mulf %250, %92 : vector<16x128xf32>
    %252 = arith.addf %248, %251 : vector<16x128xf32>
    %c14 = arith.constant 14 : index
    %253 = memref.load %arg1[%c14] : memref<27xf32, #tpu.memory_space<smem>>
    %254 = vector.broadcast %253 : f32 to vector<16x128xf32>
    %255 = arith.mulf %254, %95 : vector<16x128xf32>
    %256 = arith.addf %252, %255 : vector<16x128xf32>
    %c17 = arith.constant 17 : index
    %257 = memref.load %arg1[%c17] : memref<27xf32, #tpu.memory_space<smem>>
    %258 = vector.broadcast %257 : f32 to vector<16x128xf32>
    %259 = arith.mulf %258, %96 : vector<16x128xf32>
    %260 = arith.addf %256, %259 : vector<16x128xf32>
    %c23 = arith.constant 23 : index
    %261 = memref.load %arg1[%c23] : memref<27xf32, #tpu.memory_space<smem>>
    %262 = vector.broadcast %261 : f32 to vector<16x128xf32>
    %263 = arith.mulf %262, %97 : vector<16x128xf32>
    %264 = arith.addf %260, %263 : vector<16x128xf32>
    %c26 = arith.constant 26 : index
    %265 = memref.load %arg1[%c26] : memref<27xf32, #tpu.memory_space<smem>>
    %c20 = arith.constant 20 : index
    %266 = memref.load %arg1[%c20] : memref<27xf32, #tpu.memory_space<smem>>
    %267 = arith.subf %265, %266 : f32
    %268 = vector.broadcast %267 : f32 to vector<16x128xf32>
    %269 = arith.mulf %268, %98 : vector<16x128xf32>
    %270 = arith.addf %264, %269 : vector<16x128xf32>
    %c20_48 = arith.constant 20 : index
    %271 = memref.load %arg1[%c20_48] : memref<27xf32, #tpu.memory_space<smem>>
    %c26_49 = arith.constant 26 : index
    %272 = memref.load %arg1[%c26_49] : memref<27xf32, #tpu.memory_space<smem>>
    %273 = arith.addf %271, %272 : f32
    %274 = vector.broadcast %273 : f32 to vector<16x128xf32>
    %275 = arith.mulf %274, %99 : vector<16x128xf32>
    %276 = arith.subf %270, %275 : vector<16x128xf32>
    %c20_50 = arith.constant 20 : index
    %277 = memref.load %arg1[%c20_50] : memref<27xf32, #tpu.memory_space<smem>>
    %cst_51 = arith.constant 2.000000e+00 : f32
    %278 = arith.mulf %cst_51, %277 : f32
    %279 = vector.broadcast %278 : f32 to vector<16x128xf32>
    %280 = arith.mulf %279, %100 : vector<16x128xf32>
    %281 = arith.addf %276, %280 : vector<16x128xf32>
    %282 = arith.mulf %281, %0 : vector<16x128xf32>
    %c127_i32_52 = arith.constant 127 : i32
    %283 = tpu.dynamic_rotate %282 by %c127_i32_52 dim 1 : vector<16x128xf32>, i32 -> vector<16x128xf32>
    %284 = arith.mulf %283, %19 : vector<16x128xf32>
    %285 = arith.addf %282, %284 : vector<16x128xf32>
    %c1_i32_53 = arith.constant 1 : i32
    %286 = tpu.dynamic_rotate %282 by %c1_i32_53 dim 1 : vector<16x128xf32>, i32 -> vector<16x128xf32>
    %287 = arith.mulf %286, %15 : vector<16x128xf32>
    %288 = arith.addf %285, %287 : vector<16x128xf32>
    %c15_i32_54 = arith.constant 15 : i32
    %289 = tpu.dynamic_rotate %288 by %c15_i32_54 dim 0 : vector<16x128xf32>, i32 -> vector<16x128xf32>
    %290 = arith.mulf %289, %11 : vector<16x128xf32>
    %291 = arith.addf %288, %290 : vector<16x128xf32>
    %c1_i32_55 = arith.constant 1 : i32
    %292 = tpu.dynamic_rotate %288 by %c1_i32_55 dim 0 : vector<16x128xf32>, i32 -> vector<16x128xf32>
    %293 = arith.mulf %292, %7 : vector<16x128xf32>
    %294 = arith.addf %291, %293 : vector<16x128xf32>
    %cst_56 = arith.constant 0.111111112 : f32
    %295 = vector.broadcast %cst_56 : f32 to vector<16x128xf32>
    %296 = arith.mulf %294, %295 : vector<16x128xf32>
    %297 = arith.subf %282, %296 : vector<16x128xf32>
    %c2_57 = arith.constant 2 : index
    %c0_58 = arith.constant 0 : index
    %c0_59 = arith.constant 0 : index
    %298 = vector.load %arg5[%c2_57, %c0_58, %c0_59] : memref<3x16x128xf32, #tpu.memory_space<vmem>>, vector<1x16x128xf32>
    %299 = vector.shape_cast %298 : vector<1x16x128xf32> to vector<16x128xf32>
    %300 = arith.subf %297, %299 : vector<16x128xf32>
    %301 = arith.mulf %300, %300 : vector<16x128xf32>
    %302 = arith.mulf %301, %0 : vector<16x128xf32>
    %303 = vector.shape_cast %302 : vector<16x128xf32> to vector<1x16x128xf32>
    %cst_60 = arith.constant dense<0.000000e+00> : vector<1xf32>
    %304 = vector.multi_reduction <add>, %303, %cst_60 [1, 2] : vector<1x16x128xf32> to vector<1xf32>
    %305 = vector.shape_cast %304 : vector<1xf32> to vector<1x1x1xf32>
    %306 = vector.extract %305[0, 0, 0] : f32 from vector<1x1x1xf32>
    %307 = arith.addf %238, %306 : f32
    %308 = arith.mulf %307, %1 : f32
    %309 = vector.broadcast %308 : f32 to vector<8x128xf32>
    %c0_61 = arith.constant 0 : index
    %c0_62 = arith.constant 0 : index
    %c0_63 = arith.constant 0 : index
    %310 = vector.load %arg7[%c0_61, %c0_62, %c0_63] : memref<1x8x128xf32, #tpu.memory_space<vmem>>, vector<1x8x128xf32>
    %311 = vector.shape_cast %310 : vector<1x8x128xf32> to vector<8x128xf32>
    %312 = vector.shape_cast %309 : vector<8x128xf32> to vector<1x8x128xf32>
    tpu.vector_store %arg7[%c0_61, %c0_62, %c0_63], %312 {strides = array<i32>} : memref<1x8x128xf32, #tpu.memory_space<vmem>>, vector<1x8x128xf32>,
    return
  }
  func.func @transform_0(%arg0: i32) -> i32 {
    %c0_i32 = arith.constant 0 : i32
    %c0_i32_0 = arith.constant 0 : i32
    return %c0_i32 : i32
  }
  func.func @transform_1(%arg0: i32) -> i32 {
    %c0_i32 = arith.constant 0 : i32
    %c0_i32_0 = arith.constant 0 : i32
    return %c0_i32 : i32
  }
  func.func @transform_2(%arg0: i32) -> i32 {
    %c0_i32 = arith.constant 0 : i32
    %c0_i32_0 = arith.constant 0 : i32
    return %c0_i32 : i32
  }
  func.func @transform_3(%arg0: i32) -> (i32, i32, i32) {
    %c0_i32 = arith.constant 0 : i32
    %c0_i32_0 = arith.constant 0 : i32
    %c0_i32_1 = arith.constant 0 : i32
    return %arg0, %c0_i32, %c0_i32_0 : i32, i32, i32
  }
  func.func @transform_4(%arg0: i32) -> (i32, i32, i32) {
    %c0_i32 = arith.constant 0 : i32
    %c0_i32_0 = arith.constant 0 : i32
    %c0_i32_1 = arith.constant 0 : i32
    %c0_i32_2 = arith.constant 0 : i32
    return %c0_i32, %c0_i32_0, %c0_i32_1 : i32, i32, i32
  }
  func.func @transform_5(%arg0: i32) -> (i32, i32) {
    %c0_i32 = arith.constant 0 : i32
    %c0_i32_0 = arith.constant 0 : i32
    %c0_i32_1 = arith.constant 0 : i32
    return %c0_i32, %c0_i32_0 : i32, i32
  }
  func.func @transform_6(%arg0: i32) -> (i32, i32, i32) {
    %c0_i32 = arith.constant 0 : i32
    %c0_i32_0 = arith.constant 0 : i32
    %c0_i32_1 = arith.constant 0 : i32
    return %arg0, %c0_i32, %c0_i32_0 : i32, i32, i32
  }
}

</mosaic_0001>

<llo_original>
// kernel: _forward.1
$region0: #{_forward.1}
  #allocation0 [shape = 'u32[]', space=smem, size = 0x4, offset = 0x4, fixed_abs, tag = 'smem constant byte address 0x4 - core index']
  #allocation1 [shape = 'u32[144,128]{1,0:T(1,128)}', space=vmem, size = 0x12000, scoped, tag = 'internal scratch']
  #allocation2 [shape = 'f32[1]{0:T(128)S(6)}', space=smem, size = 0x200, scoped, tag = 'scoped memory for _forward.1']
  %s0 = inlined_call_operand.vmem [shape: f32[27], index: 0, kind: input, shape index: {}]
  %s1 = inlined_call_operand.<no memory space> [shape: f32[1], index: 1, kind: input, shape index: {}]
  %s2 = inlined_call_operand.vmem [shape: f32[9], index: 2, kind: input, shape index: {}]
  %s3 = inlined_call_operand.hbm [shape: f32[2,16,128], index: 3, kind: input, shape index: {}]
  %s4 = inlined_call_operand.hbm [shape: f32[3,16,128], index: 4, kind: input, shape index: {}]
  %s5 = inlined_call_operand.vmem [shape: f32[16,128], index: 5, kind: input, shape index: {}]
  %s6 = inlined_call_operand.vmem [shape: f32[2,8,128], index: 6, kind: output, shape index: {}]
  %s7 = sld [smem:[#allocation0]]
  $region73: #{_forward.1} parent=0
    _
  %s9 = ssub.s32 1, %s7
  %s10 = scalar_select 0, %s9, %s7
  %11 = sst [smem:[#allocation2]] %s1
  $region1: #{_forward.1} parent=0
    #allocation3 [shape = 'u8[512]{0}', space=smem, size = 0x200, scoped, tag = 'input window, operand 0, single buffered']
    #allocation4 [shape = 's32[2]{0}', space=sflag, size = 0x8, scoped, tag = 'scoped memory for _forward.1']
    #allocation5 [shape = 's32[2]{0}', space=sflag, size = 0x8, scoped, tag = 'scoped memory for _forward.1']
    #allocation6 [shape = 'u8[512]{0}', space=smem, size = 0x200, scoped, tag = 'input window, operand 2, single buffered']
    #allocation7 [shape = 's32[1]{0}', space=sflag, size = 0x4, scoped, tag = 'scoped memory for _forward.1']
    #allocation8 [shape = 'u8[16384]{0}', space=vmem, size = 0x4000, scoped, tag = 'input window, operand 3']
    #allocation9 [shape = 'u8[24576]{0}', space=vmem, size = 0x6000, scoped, tag = 'input window, operand 4, single buffered']
    #allocation10 [shape = 's32[1]{0}', space=sflag, size = 0x4, scoped, tag = 'scoped memory for _forward.1']
    %12 = vsyncpa [#allocation5], 0
    %13 = vsyncpa [#allocation7], 0
    %14 = vsyncpa [#allocation4], 0
    %s15 = scalar_lea.sflag [#allocation4], 1
    %16 = vsyncpa %s15, 0
    %17 = vsyncpa [#allocation10], 0
    loop: start=0, step=1, limit=4
    $region2: #{_forward.1} parent=1 // loop_pre_header
      _
    $region3: #{_forward.1} parent=1 // loop_header
      %s19 = sphi 0, %s23
      %p20 = scmp.ge.s32.totalorder %s19, 4
      %s27 = sphi 0, %s27
      %s29 = sphi 0, %s27
      %s30 = sphi 0, %s29
      %s44 = sphi 0, %s30
      %s48 = sphi 0, %s48
      %s50 = sphi 0, %s48
      %s51 = sphi 0, %s50
      %s65 = sphi 0, %s51
      %s69 = sphi 0, %s69
      %s71 = sphi 0, %s69
      %s72 = sphi 0, %s71
      %s86 = sphi 0, %s72
      %s92 = sphi 0, %s94
      %s95 = sphi 0, %s92
      %s96 = sphi 0, %s95
      %s112 = sphi 0, %s96
      %s116 = sphi 0, %s116
      %s118 = sphi 0, %s116
      %s119 = sphi 0, %s118
      %s133 = sphi 0, %s119
      %s137 = sphi 0, %s137
      %s139 = sphi 0, %s137
      %s140 = sphi 0, %s139
      %s154 = sphi 0, %s140
      %s160 = sphi 0, %s162
      %s163 = sphi 0, %s160
      %s164 = sphi 0, %s163
      %s180 = sphi 0, %s164
    $region4: #{_forward.1} parent=1 // loop_header_branch
      %22 = sbr.rel (%p20) target = $region8
    $region5: #{_forward.1} parent=1 // loop_body
      %s24 = ssub.s32 %s19, 1
      %s25 = ssub.s32 %s19, 2
      %s26 = sadd.s32 %s19, 1
      %s28 = sadd.s32 %s27, 1
      %p31 = scmp.eq.s32.totalorder %s19, 1
      %p32 = scmp.ne.s32.totalorder %s27, %s29
      %p33 = scmp.eq.s32.totalorder %s19, 0
      %p34 = por %p32, %p33
      %p35 = scmp.ne.s32.totalorder %s27, %s29
      %p36 = scmp.eq.s32.totalorder %s24, 1
      %p37 = por %p35, %p36
      %p38 = scmp.ne.s32.totalorder %s29, %s30
      %p39 = scmp.eq.s32.totalorder %s24, 0
      %p40 = por %p38, %p39
      %p41 = scmp.ne.s32.totalorder %s29, %s30
      %p42 = scmp.eq.s32.totalorder %s25, 1
      %p43 = por %p41, %p42
      %p45 = scmp.ne.s32.totalorder %s30, %s44
      %p46 = scmp.eq.s32.totalorder %s25, 0
      %p47 = por %p45, %p46
      %s49 = sadd.s32 %s48, 1
      %p52 = scmp.eq.s32.totalorder %s19, 1
      %p53 = scmp.ne.s32.totalorder %s48, %s50
      %p54 = scmp.eq.s32.totalorder %s19, 0
      %p55 = por %p53, %p54
      %p56 = scmp.ne.s32.totalorder %s48, %s50
      %p57 = scmp.eq.s32.totalorder %s24, 1
      %p58 = por %p56, %p57
      %p59 = scmp.ne.s32.totalorder %s50, %s51
      %p60 = scmp.eq.s32.totalorder %s24, 0
      %p61 = por %p59, %p60
      %p62 = scmp.ne.s32.totalorder %s50, %s51
      %p63 = scmp.eq.s32.totalorder %s25, 1
      %p64 = por %p62, %p63
      %p66 = scmp.ne.s32.totalorder %s51, %s65
      %p67 = scmp.eq.s32.totalorder %s25, 0
      %p68 = por %p66, %p67
      %s70 = sadd.s32 %s69, 1
      %p73 = scmp.eq.s32.totalorder %s19, 1
      %p74 = scmp.ne.s32.totalorder %s69, %s71
      %p75 = scmp.eq.s32.totalorder %s19, 0
      %p76 = por %p74, %p75
      %p77 = scmp.ne.s32.totalorder %s69, %s71
      %p78 = scmp.eq.s32.totalorder %s24, 1
      %p79 = por %p77, %p78
      %p80 = scmp.ne.s32.totalorder %s71, %s72
      %p81 = scmp.eq.s32.totalorder %s24, 0
      %p82 = por %p80, %p81
      %p83 = scmp.ne.s32.totalorder %s71, %s72
      %p84 = scmp.eq.s32.totalorder %s25, 1
      %p85 = por %p83, %p84
      %p87 = scmp.ne.s32.totalorder %s72, %s86
      %p88 = scmp.eq.s32.totalorder %s25, 0
      %p89 = por %p87, %p88
      %s90 = ssub.s32 %s19, %s26
      %p91 = scmp.eq.s32.totalorder %s90, 0
      %s93 = sadd.s32 %s92, 1
      %s94 = scalar_select %p91, %s92, %s93
      %p97 = pneg %p91
      %p98 = scmp.eq.s32.totalorder %s19, 1
      %p99 = por %p97, %p98
      %p100 = scmp.ne.s32.totalorder %s92, %s95
      %p101 = scmp.eq.s32.totalorder %s19, 0
      %p102 = por %p100, %p101
      %p103 = scmp.ne.s32.totalorder %s92, %s95
      %p104 = scmp.eq.s32.totalorder %s24, 1
      %p105 = por %p103, %p104
      %p106 = scmp.ne.s32.totalorder %s95, %s96
      %p107 = scmp.eq.s32.totalorder %s24, 0
      %p108 = por %p106, %p107
      %p109 = scmp.ne.s32.totalorder %s95, %s96
      %p110 = scmp.eq.s32.totalorder %s25, 1
      %p111 = por %p109, %p110
      %p113 = scmp.ne.s32.totalorder %s96, %s112
      %p114 = scmp.eq.s32.totalorder %s25, 0
      %p115 = por %p113, %p114
      %s117 = sadd.s32 %s116, 1
      %p120 = scmp.eq.s32.totalorder %s19, 1
      %p121 = scmp.ne.s32.totalorder %s116, %s118
      %p122 = scmp.eq.s32.totalorder %s19, 0
      %p123 = por %p121, %p122
      %p124 = scmp.ne.s32.totalorder %s116, %s118
      %p125 = scmp.eq.s32.totalorder %s24, 1
      %p126 = por %p124, %p125
      %p127 = scmp.ne.s32.totalorder %s118, %s119
      %p128 = scmp.eq.s32.totalorder %s24, 0
      %p129 = por %p127, %p128
      %p130 = scmp.ne.s32.totalorder %s118, %s119
      %p131 = scmp.eq.s32.totalorder %s25, 1
      %p132 = por %p130, %p131
      %p134 = scmp.ne.s32.totalorder %s119, %s133
      %p135 = scmp.eq.s32.totalorder %s25, 0
      %p136 = por %p134, %p135
      %s138 = sadd.s32 %s137, 1
      %p141 = scmp.eq.s32.totalorder %s19, 1
      %p142 = scmp.ne.s32.totalorder %s137, %s139
      %p143 = scmp.eq.s32.totalorder %s19, 0
      %p144 = por %p142, %p143
      %p145 = scmp.ne.s32.totalorder %s137, %s139
      %p146 = scmp.eq.s32.totalorder %s24, 1
      %p147 = por %p145, %p146
      %p148 = scmp.ne.s32.totalorder %s139, %s140
      %p149 = scmp.eq.s32.totalorder %s24, 0
      %p150 = por %p148, %p149
      %p151 = scmp.ne.s32.totalorder %s139, %s140
      %p152 = scmp.eq.s32.totalorder %s25, 1
      %p153 = por %p151, %p152
      %p155 = scmp.ne.s32.totalorder %s140, %s154
      %p156 = scmp.eq.s32.totalorder %s25, 0
      %p157 = por %p155, %p156
      %s158 = ssub.s32 %s19, %s26
      %p159 = scmp.eq.s32.totalorder %s158, 0
      %s161 = sadd.s32 %s160, 1
      %s162 = scalar_select %p159, %s160, %s161
      %p165 = pneg %p159
      %p166 = scmp.eq.s32.totalorder %s19, 1
      %p167 = por %p165, %p166
      %p168 = scmp.ne.s32.totalorder %s160, %s163
      %p169 = scmp.eq.s32.totalorder %s19, 0
      %p170 = por %p168, %p169
      %p171 = scmp.ne.s32.totalorder %s160, %s163
      %p172 = scmp.eq.s32.totalorder %s24, 1
      %p173 = por %p171, %p172
      %p174 = scmp.ne.s32.totalorder %s163, %s164
      %p175 = scmp.eq.s32.totalorder %s24, 0
      %p176 = por %p174, %p175
      %p177 = scmp.ne.s32.totalorder %s163, %s164
      %p178 = scmp.eq.s32.totalorder %s25, 1
      %p179 = por %p177, %p178
      %p181 = scmp.ne.s32.totalorder %s164, %s180
      %p182 = scmp.eq.s32.totalorder %s25, 0
      %p183 = por %p181, %p182
      %p184 = scmp.le.s32.totalorder 1, %s19
      %p185 = scmp.lt.s32.totalorder %s19, 3
      %p186 = pnand %p184, %p185
      %p187 = pneg %p186
      // Predicated region
      $region9: #{_forward.1} parent=5 // pred_check
        _
      $region10: #{_forward.1} parent=5 // pred_check_branch
        %189 = sbr.rel (%p186) target = $region12
      $region11: #{_forward.1} parent=5 // pred_region
        %s190 = ssub.s32 %s19, 1
        // Predicated region
        $region13: #{_forward.1} parent=11 // pred_check
          %p191 = pneg %p40
        $region14: #{_forward.1} parent=11 // pred_check_branch
          %193 = sbr.rel (%p191) target = $region16
        $region15: #{_forward.1} parent=11 // pred_region
          %s195 = ssub.s32 16, 16
          %196 = vsyncadd [#allocation5], %s195
          %s198 = sshll.u32 %s0, 4
          %s199 = int_to_ptr.vmem [resolvable:$true] %s198
          %201 = dma.vmem_to_smem %s199, 16, [#allocation3], [#allocation5]
        $region16: #{_forward.1} parent=11 // pred_fallthru
          _
        // Predicated region
        $region17: #{_forward.1} parent=11 // pred_check
          %p202 = pneg %p61
        $region18: #{_forward.1} parent=11 // pred_check_branch
          %204 = sbr.rel (%p202) target = $region20
        $region19: #{_forward.1} parent=11 // pred_region
          _
        $region20: #{_forward.1} parent=11 // pred_fallthru
          _
        // Predicated region
        $region21: #{_forward.1} parent=11 // pred_check
          %p205 = pneg %p82
        $region22: #{_forward.1} parent=11 // pred_check_branch
          %207 = sbr.rel (%p205) target = $region24
        $region23: #{_forward.1} parent=11 // pred_region
          %s209 = ssub.s32 16, 16
          %210 = vsyncadd [#allocation7], %s209
          %s212 = sshll.u32 %s2, 4
          %s213 = int_to_ptr.vmem [resolvable:$true] %s212
          %215 = dma.vmem_to_smem %s213, 16, [#allocation6], [#allocation7]
        $region24: #{_forward.1} parent=11 // pred_fallthru
          _
        // Predicated region
        $region25: #{_forward.1} parent=11 // pred_check
          %p216 = pneg %p129
        $region26: #{_forward.1} parent=11 // pred_check_branch
          %218 = sbr.rel (%p216) target = $region28
        $region27: #{_forward.1} parent=11 // pred_region
          %s220 = ssub.s32 768, 768
          %221 = vsyncadd [#allocation10], %s220
          %s222 = sshll.u32 [#allocation9], 4
          %s223 = int_to_ptr.vmem [resolvable:$true] %s222
          %228 = dma.hbm_to_vmem [thread:$0]  %s4, 768, %s223, [#allocation10], 128, 128, 8
        $region28: #{_forward.1} parent=11 // pred_fallthru
          _
        // Predicated region
        $region29: #{_forward.1} parent=11 // pred_check
          %p229 = pneg %p150
        $region30: #{_forward.1} parent=11 // pred_check_branch
          %231 = sbr.rel (%p229) target = $region32
        $region31: #{_forward.1} parent=11 // pred_region
          _
        $region32: #{_forward.1} parent=11 // pred_fallthru
          _
      $region12: #{_forward.1} parent=5 // pred_fallthru
        _
      %p232 = scmp.lt.s32.totalorder %s19, 2
      // Predicated region
      $region33: #{_forward.1} parent=5 // pred_check
        %p233 = pneg %p232
      $region34: #{_forward.1} parent=5 // pred_check_branch
        %235 = sbr.rel (%p233) target = $region36
      $region35: #{_forward.1} parent=5 // pred_region
        // Predicated region
        $region37: #{_forward.1} parent=35 // pred_check
          %p236 = pneg %p102
        $region38: #{_forward.1} parent=35 // pred_check_branch
          %238 = sbr.rel (%p236) target = $region40
        $region39: #{_forward.1} parent=35 // pred_region
          %s239 = sand.u32 %s92, 1
          %s240 = scalar_lea.sflag [#allocation4], %s239
          %s241 = sand.u32 %s92, 1
          %s242 = smul.addr %s241, 16
          %s243 = scalar_lea.vmem [#allocation8], %s242
          %s245 = ssub.s32 256, 256
          %246 = vsyncadd %s240, %s245
          %s247 = smul.addr %s19, 2
          %s248 = smul.addr %s247, 128
          %s249 = scalar_lea.hbm %s3, %s248
          %s250 = sshll.u32 %s243, 4
          %s251 = int_to_ptr.vmem [resolvable:$true] %s250
          %256 = dma.hbm_to_vmem [thread:$0]  %s249, 256, %s251, %s240, 128, 128, 8
        $region40: #{_forward.1} parent=35 // pred_fallthru
          _
      $region36: #{_forward.1} parent=5 // pred_fallthru
        _
      %p257 = scmp.le.s32.totalorder 1, %s19
      %p258 = scmp.lt.s32.totalorder %s19, 3
      %p259 = pnand %p257, %p258
      %p260 = pneg %p259
      // Predicated region
      $region41: #{_forward.1} parent=5 // pred_check
        _
      $region42: #{_forward.1} parent=5 // pred_check_branch
        %262 = sbr.rel (%p259) target = $region44
      $region43: #{_forward.1} parent=5 // pred_region
        %s263 = ssub.s32 %s19, 1
        // Predicated region
        $region45: #{_forward.1} parent=43 // pred_check
          %p264 = pneg %p40
        $region46: #{_forward.1} parent=43 // pred_check_branch
          %266 = sbr.rel (%p264) target = $region48
        $region47: #{_forward.1} parent=43 // pred_region
          %267 = dma.done [#allocation5], 16
        $region48: #{_forward.1} parent=43 // pred_fallthru
          _
        // Predicated region
        $region49: #{_forward.1} parent=43 // pred_check
          %p268 = pneg %p82
        $region50: #{_forward.1} parent=43 // pred_check_branch
          %270 = sbr.rel (%p268) target = $region52
        $region51: #{_forward.1} parent=43 // pred_region
          %271 = dma.done [#allocation7], 16
        $region52: #{_forward.1} parent=43 // pred_fallthru
          _
        %s272 = sand.u32 %s95, 1
        %s273 = scalar_lea.sflag [#allocation4], %s272
        %s274 = sand.u32 %s95, 1
        %s275 = smul.addr %s274, 16
        %s276 = scalar_lea.vmem [#allocation8], %s275
        // Predicated region
        $region53: #{_forward.1} parent=43 // pred_check
          %p277 = pneg %p108
        $region54: #{_forward.1} parent=43 // pred_check_branch
          %279 = sbr.rel (%p277) target = $region56
        $region55: #{_forward.1} parent=43 // pred_region
          %280 = dma.done %s273, 256
        $region56: #{_forward.1} parent=43 // pred_fallthru
          _
        // Predicated region
        $region57: #{_forward.1} parent=43 // pred_check
          %p281 = pneg %p129
        $region58: #{_forward.1} parent=43 // pred_check_branch
          %283 = sbr.rel (%p281) target = $region60
        $region59: #{_forward.1} parent=43 // pred_region
          %284 = dma.done [#allocation10], 768
        $region60: #{_forward.1} parent=43 // pred_fallthru
          _
        %285 = sfence
        %p286 = pneg %p40
        %p287 = pneg %p37
        %p288 = pneg %p61
        %p289 = pneg %p58
        %p290 = pneg %p82
        %p291 = pneg %p79
        %s292 = sand.u32 %s95, 1
        %s293 = scalar_lea.sflag [#allocation4], %s292
        %s294 = sand.u32 %s95, 1
        %s295 = smul.addr %s294, 16
        %s296 = scalar_lea.vmem [#allocation8], %s295
        %p297 = pneg %p108
        %p298 = pneg %p105
        %p299 = pneg %p129
        %p300 = pneg %p126
        %p301 = pneg %p150
        %p302 = pneg %p147
        %p303 = pneg %p176
        %p304 = pneg %p173
        %p305 = scmp.lt.s32.totalorder %s24, 1
        %s306 = scalar_select %p305, %s24, 1
        %s307 = smul.addr %s306, 8
        %s308 = scalar_lea.vmem %s6, %s307
        %p309 = scmp.lt.s32.totalorder %s24, 1
        %s310 = scalar_select %p309, %s24, 1
        %s311 = smul.addr %s310, 8
        %s312 = scalar_lea.vmem %s6, %s311
        %v313 = vld [vmem:[%s5] sm:$0xff]
        %v314 = vld [vmem:[%s5 + $0x8] sm:$0xff]
        %s315 = sld [smem:[#allocation2]]
        %v316 = vlaneseq
        %v317 = vshrl.u32 %v316, 7
        %v318 = vadd.s32 %v317, 8
        %v319 = vlaneseq
        %v320 = vand.u32 %v319, 127
        %vm321 = vcmp.ne.s32.totalorder %v317, 0
        %vm322 = vcmp.ne.s32.totalorder %v318, 0
        %v323 = vsel %vm321, 1, 0
        %v324 = vsel %vm322, 1, 0
        %v325 = vcvt.s32.f32 %v323
        %v326 = vcvt.s32.f32 %v324
        %vm327 = vcmp.ne.s32.totalorder %v317, 15
        %vm328 = vcmp.ne.s32.totalorder %v318, 15
        %v329 = vsel %vm327, 1, 0
        %v330 = vsel %vm328, 1, 0
        %v331 = vcvt.s32.f32 %v329
        %v332 = vcvt.s32.f32 %v330
        %vm333 = vcmp.ne.s32.totalorder %v320, 0
        %v334 = vsel %vm333, 1, 0
        %v335 = vcvt.s32.f32 %v334
        %vm336 = vcmp.ne.s32.totalorder %v320, 127
        %v337 = vsel %vm336, 1, 0
        %v338 = vcvt.s32.f32 %v337
        %v339 = vcvt.s32.f32 %v320
        %v340 = vcvt.s32.f32 %v317
        %v341 = vcvt.s32.f32 %v318
        %s342 = sld [smem:[#allocation6]]
        %v343 = vstv %s342
        %v344 = vmul.f32 %v343, %v339
        %s345 = sld [smem:[#allocation6 + $0x1]]
        %v346 = vstv %s345
        %v347 = vmul.f32 %v346, %v340
        %v348 = vmul.f32 %v346, %v341
        %v349 = vadd.f32 %v344, %v347
        %v350 = vadd.f32 %v344, %v348
        %s351 = sld [smem:[#allocation6 + $0x2]]
        %v352 = vstv %s351
        %v353 = vadd.f32 %v349, %v352
        %v354 = vadd.f32 %v350, %v352
        %s355 = sld [smem:[#allocation6 + $0x3]]
        %v356 = vstv %s355
        %v357 = vmul.f32 %v356, %v339
        %s358 = sld [smem:[#allocation6 + $0x4]]
        %v359 = vstv %s358
        %v360 = vmul.f32 %v359, %v340
        %v361 = vmul.f32 %v359, %v341
        %v362 = vadd.f32 %v357, %v360
        %v363 = vadd.f32 %v357, %v361
        %s364 = sld [smem:[#allocation6 + $0x5]]
        %v365 = vstv %s364
        %v366 = vadd.f32 %v362, %v365
        %v367 = vadd.f32 %v363, %v365
        %s368 = sld [smem:[#allocation6 + $0x6]]
        %v369 = vstv %s368
        %v370 = vmul.f32 %v369, %v339
        %s371 = sld [smem:[#allocation6 + $0x7]]
        %v372 = vstv %s371
        %v373 = vmul.f32 %v372, %v340
        %v374 = vmul.f32 %v372, %v341
        %v375 = vadd.f32 %v370, %v373
        %v376 = vadd.f32 %v370, %v374
        %s377 = sld [smem:[#allocation6 + $0x8]]
        %v378 = vstv %s377
        %v379 = vadd.f32 %v375, %v378
        %v380 = vadd.f32 %v376, %v378
        %v381 = vld [vmem:[%s276] sm:$0xff]
        %v382 = vld [vmem:[%s276 + $0x8] sm:$0xff]
        %v383 = vmul.f32 %v353, %v381
        %v384 = vmul.f32 %v354, %v382
        %v385 = vmul.f32 %v366, %v381
        %v386 = vmul.f32 %v367, %v382
        %v387 = vmul.f32 %v379, %v381
        %v388 = vmul.f32 %v380, %v382
        %389 = vrot.lane.b32.xlu0 %v383, 127
        %v390 = vpop.permute.xlu0 %389
        %391 = vrot.lane.b32.xlu0 %v384, 127
        %v392 = vpop.permute.xlu0 %391
        %v393 = vmul.f32 %v390, %v338
        %v394 = vmul.f32 %v392, %v338
        %v395 = vsub.f32 %v393, %v383
        %v396 = vsub.f32 %v394, %v384
        %397 = vrot.lane.b32.xlu0 %v385, 127
        %v398 = vpop.permute.xlu0 %397
        %399 = vrot.lane.b32.xlu0 %v386, 127
        %v400 = vpop.permute.xlu0 %399
        %v401 = vmul.f32 %v398, %v338
        %v402 = vmul.f32 %v400, %v338
        %v403 = vsub.f32 %v401, %v385
        %v404 = vsub.f32 %v402, %v386
        %405 = vrot.lane.b32.xlu0 %v387, 127
        %v406 = vpop.permute.xlu0 %405
        %407 = vrot.lane.b32.xlu0 %v388, 127
        %v408 = vpop.permute.xlu0 %407
        %v409 = vmul.f32 %v406, %v338
        %v410 = vmul.f32 %v408, %v338
        %v411 = vsub.f32 %v409, %v387
        %v412 = vsub.f32 %v410, %v388
        %v413 = vrot.slane %v383, 1
        %v414 = vrot.slane %v384, 1
        %vm415 = vcmp.lt.s32.totalorder %v317, 7
        %v416 = vsel %vm415, %v413, %v414
        %v417 = vsel %vm415, %v414, %v413
        %v418 = vmul.f32 %v416, %v331
        %v419 = vmul.f32 %v417, %v332
        %v420 = vsub.f32 %v418, %v383
        %v421 = vsub.f32 %v419, %v384
        %v422 = vrot.slane %v385, 1
        %v423 = vrot.slane %v386, 1
        %v424 = vsel %vm415, %v422, %v423
        %v425 = vsel %vm415, %v423, %v422
        %v426 = vmul.f32 %v424, %v331
        %v427 = vmul.f32 %v425, %v332
        %v428 = vsub.f32 %v426, %v385
        %v429 = vsub.f32 %v427, %v386
        %v430 = vrot.slane %v387, 1
        %v431 = vrot.slane %v388, 1
        %v432 = vsel %vm415, %v430, %v431
        %v433 = vsel %vm415, %v431, %v430
        %v434 = vmul.f32 %v432, %v331
        %v435 = vmul.f32 %v433, %v332
        %v436 = vsub.f32 %v434, %v387
        %v437 = vsub.f32 %v435, %v388
        %v438 = vmul.f32 %v403, %v436
        %v439 = vmul.f32 %v404, %v437
        %v440 = vmul.f32 %v411, %v428
        %v441 = vmul.f32 %v412, %v429
        %v442 = vsub.f32 %v438, %v440
        %v443 = vsub.f32 %v439, %v441
        %v444 = vmul.f32 %v411, %v420
        %v445 = vmul.f32 %v412, %v421
        %v446 = vmul.f32 %v395, %v436
        %v447 = vmul.f32 %v396, %v437
        %v448 = vsub.f32 %v444, %v446
        %v449 = vsub.f32 %v445, %v447
        %v450 = vmul.f32 %v395, %v428
        %v451 = vmul.f32 %v396, %v429
        %v452 = vmul.f32 %v403, %v420
        %v453 = vmul.f32 %v404, %v421
        %v454 = vsub.f32 %v450, %v452
        %v455 = vsub.f32 %v451, %v453
        %v456 = vmul.f32 %v442, %v442
        %v457 = vmul.f32 %v443, %v443
        %v458 = vmul.f32 %v448, %v448
        %v459 = vmul.f32 %v449, %v449
        %v460 = vadd.f32 %v456, %v458
        %v461 = vadd.f32 %v457, %v459
        %v462 = vmul.f32 %v454, %v454
        %v463 = vmul.f32 %v455, %v455
        %v464 = vadd.f32 %v460, %v462
        %v465 = vadd.f32 %v461, %v463
        %v466 = vmax.f32 %v464, 1e-24
        %v467 = vmax.f32 %v465, 1e-24
        %v468 = vrsqrt.pop %v466
        %v469 = vrsqrt.pop %v467
        %v470 = vmul.f32 %v442, %v468
        %v471 = vmul.f32 %v443, %v469
        %v472 = vmul.f32 %v448, %v468
        %v473 = vmul.f32 %v449, %v469
        %v474 = vmul.f32 %v454, %v468
        %v475 = vmul.f32 %v455, %v469
        %v476 = vmul.f32 %v470, %v472
        %v477 = vmul.f32 %v471, %v473
        %v478 = vmul.f32 %v472, %v474
        %v479 = vmul.f32 %v473, %v475
        %v480 = vmul.f32 %v474, %v470
        %v481 = vmul.f32 %v475, %v471
        %v482 = vmul.f32 %v470, %v470
        %v483 = vmul.f32 %v471, %v471
        %v484 = vmul.f32 %v472, %v472
        %v485 = vmul.f32 %v473, %v473
        %v486 = vmul.f32 %v474, %v474
        %v487 = vmul.f32 %v475, %v475
        %s488 = sld [smem:[#allocation3]]
        %s489 = sld [smem:[#allocation3 + $0x3]]
        %v490 = vstv %s489
        %v491 = vmul.f32 %v490, %v472
        %v492 = vmul.f32 %v490, %v473
        %v493 = vstv %s488
        %v494 = vadd.f32 %v493, %v491
        %v495 = vadd.f32 %v493, %v492
        %s496 = sld [smem:[#allocation3 + $0x6]]
        %v497 = vstv %s496
        %v498 = vmul.f32 %v497, %v474
        %v499 = vmul.f32 %v497, %v475
        %v500 = vadd.f32 %v494, %v498
        %v501 = vadd.f32 %v495, %v499
        %s502 = sld [smem:[#allocation3 + $0x9]]
        %v503 = vstv %s502
        %v504 = vmul.f32 %v503, %v470
        %v505 = vmul.f32 %v503, %v471
        %v506 = vadd.f32 %v500, %v504
        %v507 = vadd.f32 %v501, %v505
        %s508 = sld [smem:[#allocation3 + $0xc]]
        %v509 = vstv %s508
        %v510 = vmul.f32 %v509, %v476
        %v511 = vmul.f32 %v509, %v477
        %v512 = vadd.f32 %v506, %v510
        %v513 = vadd.f32 %v507, %v511
        %s514 = sld [smem:[#allocation3 + $0xf]]
        %v515 = vstv %s514
        %v516 = vmul.f32 %v515, %v478
        %v517 = vmul.f32 %v515, %v479
        %v518 = vadd.f32 %v512, %v516
        %v519 = vadd.f32 %v513, %v517
        %s520 = sld [smem:[#allocation3 + $0x15]]
        %v521 = vstv %s520
        %v522 = vmul.f32 %v521, %v480
        %v523 = vmul.f32 %v521, %v481
        %v524 = vadd.f32 %v518, %v522
        %v525 = vadd.f32 %v519, %v523
        %s526 = sld [smem:[#allocation3 + $0x18]]
        %s527 = sld [smem:[#allocation3 + $0x12]]
        %s528 = ssub.f32 %s526, %s527
        %v529 = vstv %s528
        %v530 = vmul.f32 %v529, %v482
        %v531 = vmul.f32 %v529, %v483
        %v532 = vadd.f32 %v524, %v530
        %v533 = vadd.f32 %v525, %v531
        %s534 = sadd.f32 %s527, %s526
        %v535 = vstv %s534
        %v536 = vmul.f32 %v535, %v484
        %v537 = vmul.f32 %v535, %v485
        %v538 = vsub.f32 %v532, %v536
        %v539 = vsub.f32 %v533, %v537
        %s540 = smul.f32 %s527, 2.0
        %v541 = vstv %s540
        %v542 = vmul.f32 %v541, %v486
        %v543 = vmul.f32 %v541, %v487
        %v544 = vadd.f32 %v538, %v542
        %v545 = vadd.f32 %v539, %v543
        %v546 = vmul.f32 %v544, %v313
        %v547 = vmul.f32 %v545, %v314
        %548 = vrot.lane.b32.xlu0 %v546, 127
        %v549 = vpop.permute.xlu0 %548
        %550 = vrot.lane.b32.xlu0 %v547, 127
        %v551 = vpop.permute.xlu0 %550
        %v552 = vmul.f32 %v549, %v338
        %v553 = vmul.f32 %v551, %v338
        %v554 = vadd.f32 %v546, %v552
        %v555 = vadd.f32 %v547, %v553
        %556 = vrot.lane.b32.xlu0 %v546, 1
        %v557 = vpop.permute.xlu0 %556
        %558 = vrot.lane.b32.xlu0 %v547, 1
        %v559 = vpop.permute.xlu0 %558
        %v560 = vmul.f32 %v557, %v335
        %v561 = vmul.f32 %v559, %v335
        %v562 = vadd.f32 %v554, %v560
        %v563 = vadd.f32 %v555, %v561
        %v564 = vrot.slane %v562, 1
        %v565 = vrot.slane %v563, 1
        %v566 = vsel %vm415, %v564, %v565
        %v567 = vsel %vm415, %v565, %v564
        %v568 = vmul.f32 %v566, %v331
        %v569 = vmul.f32 %v567, %v332
        %v570 = vadd.f32 %v562, %v568
        %v571 = vadd.f32 %v563, %v569
        %v572 = vrot.slane %v562, 7
        %v573 = vrot.slane %v563, 7
        %vm574 = vcmp.lt.s32.totalorder %v317, 1
        %v575 = vsel %vm574, %v572, %v573
        %v576 = vsel %vm574, %v573, %v572
        %v577 = vmul.f32 %v576, %v325
        %v578 = vmul.f32 %v575, %v326
        %v579 = vadd.f32 %v570, %v577
        %v580 = vadd.f32 %v571, %v578
        %v581 = vmul.f32 %v579, 0.11111111
        %v582 = vmul.f32 %v580, 0.11111111
        %v583 = vsub.f32 %v546, %v581
        %v584 = vsub.f32 %v547, %v582
        %v585 = vld [vmem:[#allocation9] sm:$0xff]
        %v586 = vld [vmem:[#allocation9 + $0x8] sm:$0xff]
        %v587 = vsub.f32 %v583, %v585
        %v588 = vsub.f32 %v584, %v586
        %v589 = vmul.f32 %v587, %v587
        %v590 = vmul.f32 %v588, %v588
        %v591 = vmul.f32 %v589, %v313
        %v592 = vmul.f32 %v590, %v314
        %v593 = vadd.f32 %v591, %v592
        %594 = vadd.xlane.f32.xlu0 %v593
        %v595 = vpop.xlane.xlu0 %594
        %v596 = vrot.slane %v595, 4
        %v597 = vadd.f32 %v595, %v596
        %v598 = vrot.slane %v597, 2
        %v599 = vadd.f32 %v597, %v598
        %v600 = vrot.slane %v599, 1
        %v601 = vadd.f32 %v599, %v600
        %s602 = vtos %v601
        %s603 = sadd.f32 %s602, 0.0
        %s604 = sld [smem:[#allocation3 + $0x1]]
        %s605 = sld [smem:[#allocation3 + $0x4]]
        %v606 = vstv %s605
        %v607 = vmul.f32 %v606, %v472
        %v608 = vmul.f32 %v606, %v473
        %v609 = vstv %s604
        %v610 = vadd.f32 %v609, %v607
        %v611 = vadd.f32 %v609, %v608
        %s612 = sld [smem:[#allocation3 + $0x7]]
        %v613 = vstv %s612
        %v614 = vmul.f32 %v613, %v474
        %v615 = vmul.f32 %v613, %v475
        %v616 = vadd.f32 %v610, %v614
        %v617 = vadd.f32 %v611, %v615
        %s618 = sld [smem:[#allocation3 + $0xa]]
        %v619 = vstv %s618
        %v620 = vmul.f32 %v619, %v470
        %v621 = vmul.f32 %v619, %v471
        %v622 = vadd.f32 %v616, %v620
        %v623 = vadd.f32 %v617, %v621
        %s624 = sld [smem:[#allocation3 + $0xd]]
        %v625 = vstv %s624
        %v626 = vmul.f32 %v625, %v476
        %v627 = vmul.f32 %v625, %v477
        %v628 = vadd.f32 %v622, %v626
        %v629 = vadd.f32 %v623, %v627
        %s630 = sld [smem:[#allocation3 + $0x10]]
        %v631 = vstv %s630
        %v632 = vmul.f32 %v631, %v478
        %v633 = vmul.f32 %v631, %v479
        %v634 = vadd.f32 %v628, %v632
        %v635 = vadd.f32 %v629, %v633
        %s636 = sld [smem:[#allocation3 + $0x16]]
        %v637 = vstv %s636
        %v638 = vmul.f32 %v637, %v480
        %v639 = vmul.f32 %v637, %v481
        %v640 = vadd.f32 %v634, %v638
        %v641 = vadd.f32 %v635, %v639
        %s642 = sld [smem:[#allocation3 + $0x19]]
        %s643 = sld [smem:[#allocation3 + $0x13]]
        %s644 = ssub.f32 %s642, %s643
        %v645 = vstv %s644
        %v646 = vmul.f32 %v645, %v482
        %v647 = vmul.f32 %v645, %v483
        %v648 = vadd.f32 %v640, %v646
        %v649 = vadd.f32 %v641, %v647
        %s650 = sadd.f32 %s643, %s642
        %v651 = vstv %s650
        %v652 = vmul.f32 %v651, %v484
        %v653 = vmul.f32 %v651, %v485
        %v654 = vsub.f32 %v648, %v652
        %v655 = vsub.f32 %v649, %v653
        %s656 = smul.f32 %s643, 2.0
        %v657 = vstv %s656
        %v658 = vmul.f32 %v657, %v486
        %v659 = vmul.f32 %v657, %v487
        %v660 = vadd.f32 %v654, %v658
        %v661 = vadd.f32 %v655, %v659
        %v662 = vmul.f32 %v660, %v313
        %v663 = vmul.f32 %v661, %v314
        %664 = vrot.lane.b32.xlu0 %v662, 127
        %v665 = vpop.permute.xlu0 %664
        %666 = vrot.lane.b32.xlu0 %v663, 127
        %v667 = vpop.permute.xlu0 %666
        %v668 = vmul.f32 %v665, %v338
        %v669 = vmul.f32 %v667, %v338
        %v670 = vadd.f32 %v662, %v668
        %v671 = vadd.f32 %v663, %v669
        %672 = vrot.lane.b32.xlu0 %v662, 1
        %v673 = vpop.permute.xlu0 %672
        %674 = vrot.lane.b32.xlu0 %v663, 1
        %v675 = vpop.permute.xlu0 %674
        %v676 = vmul.f32 %v673, %v335
        %v677 = vmul.f32 %v675, %v335
        %v678 = vadd.f32 %v670, %v676
        %v679 = vadd.f32 %v671, %v677
        %v680 = vrot.slane %v678, 1
        %v681 = vrot.slane %v679, 1
        %v682 = vsel %vm415, %v680, %v681
        %v683 = vsel %vm415, %v681, %v680
        %v684 = vmul.f32 %v682, %v331
        %v685 = vmul.f32 %v683, %v332
        %v686 = vadd.f32 %v678, %v684
        %v687 = vadd.f32 %v679, %v685
        %v688 = vrot.slane %v678, 7
        %v689 = vrot.slane %v679, 7
        %v690 = vsel %vm574, %v688, %v689
        %v691 = vsel %vm574, %v689, %v688
        %v692 = vmul.f32 %v691, %v325
        %v693 = vmul.f32 %v690, %v326
        %v694 = vadd.f32 %v686, %v692
        %v695 = vadd.f32 %v687, %v693
        %v696 = vmul.f32 %v694, 0.11111111
        %v697 = vmul.f32 %v695, 0.11111111
        %v698 = vsub.f32 %v662, %v696
        %v699 = vsub.f32 %v663, %v697
        %s700 = scalar_lea.vmem [#allocation9], 16
        %v701 = vld [vmem:[%s700] sm:$0xff]
        %v702 = vld [vmem:[%s700 + $0x8] sm:$0xff]
        %v703 = vsub.f32 %v698, %v701
        %v704 = vsub.f32 %v699, %v702
        %v705 = vmul.f32 %v703, %v703
        %v706 = vmul.f32 %v704, %v704
        %v707 = vmul.f32 %v705, %v313
        %v708 = vmul.f32 %v706, %v314
        %v709 = vadd.f32 %v707, %v708
        %710 = vadd.xlane.f32.xlu0 %v709
        %v711 = vpop.xlane.xlu0 %710
        %v712 = vrot.slane %v711, 4
        %v713 = vadd.f32 %v711, %v712
        %v714 = vrot.slane %v713, 2
        %v715 = vadd.f32 %v713, %v714
        %v716 = vrot.slane %v715, 1
        %v717 = vadd.f32 %v715, %v716
        %s718 = vtos %v717
        %s719 = sadd.f32 %s603, %s718
        %s720 = sld [smem:[#allocation3 + $0x2]]
        %s721 = sld [smem:[#allocation3 + $0x5]]
        %v722 = vstv %s721
        %v723 = vmul.f32 %v722, %v472
        %v724 = vmul.f32 %v722, %v473
        %v725 = vstv %s720
        %v726 = vadd.f32 %v725, %v723
        %v727 = vadd.f32 %v725, %v724
        %s728 = sld [smem:[#allocation3 + $0x8]]
        %v729 = vstv %s728
        %v730 = vmul.f32 %v729, %v474
        %v731 = vmul.f32 %v729, %v475
        %v732 = vadd.f32 %v726, %v730
        %v733 = vadd.f32 %v727, %v731
        %s734 = sld [smem:[#allocation3 + $0xb]]
        %v735 = vstv %s734
        %v736 = vmul.f32 %v735, %v470
        %v737 = vmul.f32 %v735, %v471
        %v738 = vadd.f32 %v732, %v736
        %v739 = vadd.f32 %v733, %v737
        %s740 = sld [smem:[#allocation3 + $0xe]]
        %v741 = vstv %s740
        %v742 = vmul.f32 %v741, %v476
        %v743 = vmul.f32 %v741, %v477
        %v744 = vadd.f32 %v738, %v742
        %v745 = vadd.f32 %v739, %v743
        %s746 = sld [smem:[#allocation3 + $0x11]]
        %v747 = vstv %s746
        %v748 = vmul.f32 %v747, %v478
        %v749 = vmul.f32 %v747, %v479
        %v750 = vadd.f32 %v744, %v748
        %v751 = vadd.f32 %v745, %v749
        %s752 = sld [smem:[#allocation3 + $0x17]]
        %v753 = vstv %s752
        %v754 = vmul.f32 %v753, %v480
        %v755 = vmul.f32 %v753, %v481
        %v756 = vadd.f32 %v750, %v754
        %v757 = vadd.f32 %v751, %v755
        %s758 = sld [smem:[#allocation3 + $0x1a]]
        %s759 = sld [smem:[#allocation3 + $0x14]]
        %s760 = ssub.f32 %s758, %s759
        %v761 = vstv %s760
        %v762 = vmul.f32 %v761, %v482
        %v763 = vmul.f32 %v761, %v483
        %v764 = vadd.f32 %v756, %v762
        %v765 = vadd.f32 %v757, %v763
        %s766 = sadd.f32 %s759, %s758
        %v767 = vstv %s766
        %v768 = vmul.f32 %v767, %v484
        %v769 = vmul.f32 %v767, %v485
        %v770 = vsub.f32 %v764, %v768
        %v771 = vsub.f32 %v765, %v769
        %s772 = smul.f32 %s759, 2.0
        %v773 = vstv %s772
        %v774 = vmul.f32 %v773, %v486
        %v775 = vmul.f32 %v773, %v487
        %v776 = vadd.f32 %v770, %v774
        %v777 = vadd.f32 %v771, %v775
        %v778 = vmul.f32 %v776, %v313
        %v779 = vmul.f32 %v777, %v314
        %780 = vrot.lane.b32.xlu0 %v778, 127
        %v781 = vpop.permute.xlu0 %780
        %782 = vrot.lane.b32.xlu0 %v779, 127
        %v783 = vpop.permute.xlu0 %782
        %v784 = vmul.f32 %v781, %v338
        %v785 = vmul.f32 %v783, %v338
        %v786 = vadd.f32 %v778, %v784
        %v787 = vadd.f32 %v779, %v785
        %788 = vrot.lane.b32.xlu0 %v778, 1
        %v789 = vpop.permute.xlu0 %788
        %790 = vrot.lane.b32.xlu0 %v779, 1
        %v791 = vpop.permute.xlu0 %790
        %v792 = vmul.f32 %v789, %v335
        %v793 = vmul.f32 %v791, %v335
        %v794 = vadd.f32 %v786, %v792
        %v795 = vadd.f32 %v787, %v793
        %v796 = vrot.slane %v794, 1
        %v797 = vrot.slane %v795, 1
        %v798 = vsel %vm415, %v796, %v797
        %v799 = vsel %vm415, %v797, %v796
        %v800 = vmul.f32 %v798, %v331
        %v801 = vmul.f32 %v799, %v332
        %v802 = vadd.f32 %v794, %v800
        %v803 = vadd.f32 %v795, %v801
        %v804 = vrot.slane %v794, 7
        %v805 = vrot.slane %v795, 7
        %v806 = vsel %vm574, %v804, %v805
        %v807 = vsel %vm574, %v805, %v804
        %v808 = vmul.f32 %v807, %v325
        %v809 = vmul.f32 %v806, %v326
        %v810 = vadd.f32 %v802, %v808
        %v811 = vadd.f32 %v803, %v809
        %v812 = vmul.f32 %v810, 0.11111111
        %v813 = vmul.f32 %v811, 0.11111111
        %v814 = vsub.f32 %v778, %v812
        %v815 = vsub.f32 %v779, %v813
        %s816 = scalar_lea.vmem [#allocation9], 32
        %v817 = vld [vmem:[%s816] sm:$0xff]
        %v818 = vld [vmem:[%s816 + $0x8] sm:$0xff]
        %v819 = vsub.f32 %v814, %v817
        %v820 = vsub.f32 %v815, %v818
        %v821 = vmul.f32 %v819, %v819
        %v822 = vmul.f32 %v820, %v820
        %v823 = vmul.f32 %v821, %v313
        %v824 = vmul.f32 %v822, %v314
        %v825 = vadd.f32 %v823, %v824
        %826 = vadd.xlane.f32.xlu0 %v825
        %v827 = vpop.xlane.xlu0 %826
        %v828 = vrot.slane %v827, 4
        %v829 = vadd.f32 %v827, %v828
        %v830 = vrot.slane %v829, 2
        %v831 = vadd.f32 %v829, %v830
        %v832 = vrot.slane %v831, 1
        %v833 = vadd.f32 %v831, %v832
        %s834 = vtos %v833
        %s835 = sadd.f32 %s719, %s834
        %s836 = smul.f32 %s835, %s315
        %v837 = vstv %s836
        %838 = vst [vmem:[%s312] sm:$0xff] %v837
        %p839 = scmp.lt.s32.totalorder %s24, 1
        %s840 = scalar_select %p839, %s24, 1
        %s841 = smul.addr %s840, 8
        %s842 = scalar_lea.vmem %s6, %s841
        // Predicated region
        $region61: #{_forward.1} parent=43 // pred_check
          %p843 = pneg %p173
        $region62: #{_forward.1} parent=43 // pred_check_branch
          %845 = sbr.rel (%p843) target = $region64
        $region63: #{_forward.1} parent=43 // pred_region
          _
        $region64: #{_forward.1} parent=43 // pred_fallthru
          _
      $region44: #{_forward.1} parent=5 // pred_fallthru
        _
      %p846 = scmp.le.s32.totalorder 2, %s19
      // Predicated region
      $region65: #{_forward.1} parent=5 // pred_check
        %p847 = pneg %p846
      $region66: #{_forward.1} parent=5 // pred_check_branch
        %849 = sbr.rel (%p847) target = $region68
      $region67: #{_forward.1} parent=5 // pred_region
        %s850 = ssub.s32 %s19, 2
        // Predicated region
        $region69: #{_forward.1} parent=67 // pred_check
          %p851 = pneg %p179
        $region70: #{_forward.1} parent=67 // pred_check_branch
          %853 = sbr.rel (%p851) target = $region72
        $region71: #{_forward.1} parent=67 // pred_region
          %p854 = scmp.lt.s32.totalorder %s25, 1
          %s855 = scalar_select %p854, %s25, 1
          %s856 = smul.addr %s855, 8
          %s857 = scalar_lea.vmem %s6, %s856
        $region72: #{_forward.1} parent=67 // pred_fallthru
          _
      $region68: #{_forward.1} parent=5 // pred_fallthru
        _
    $region6: #{_forward.1} parent=1 // loop_footer
      %s23 = sadd.s32 1, %s19
    $region7: #{_forward.1} parent=1 // loop_footer_branch
      %18 = sbr.rel target = $region3
    $region8: #{_forward.1} parent=1 // loop_exit
      _
    %858 = vsyncpa [#allocation4], 1
    %s859 = scalar_lea.sflag [#allocation4], 1
    %860 = vsyncpa %s859, 1
    %861 = vsyncpa [#allocation10], 1
    %862 = vsyncpa [#allocation5], 1
    %s863 = scalar_lea.sflag [#allocation5], 1
    %864 = vsyncpa %s863, 1
    %865 = vsyncpa [#allocation7], 1

</llo_original>
